<compile_context>
chip_gen: v6e
topology: v6e:2x2x1
jax: 0.10.0
libtpu: 0.0.40
codegen_flags: <defaults>
</compile_context>

<pallas_src>
import functools

import jax
import jax.numpy as jnp
from jax import lax
from jax.experimental import pallas as pl
from jax.experimental.pallas import tpu as pltpu


def _conv3x3_kernel(w_ref, p_ref, o_ref, pad_ref, *, C, h2, w2, out_c):
    # w_ref  : VMEM (9, out_c, C) f32        per-tap weight matrices, tap = 3*kh + kw
    # p_ref  : VMEM (1, C, S)     f32        pooled activations, spatial flattened
    # o_ref  : VMEM (1, out_c, S) f32
    # pad_ref: VMEM (C, S + 2*(w2+1)) f32    scratch: zero-padded flat activations
    S = h2 * w2
    P = w2 + 1  # flat zero-pad on each side: rows -1 / h2 land exactly in the pad

    p = p_ref[0]                                    # (C, S)

    # Zero-padded copy of the pooled image (vertical out-of-image taps read zeros).
    pad_ref[...] = jnp.zeros_like(pad_ref)
    pad_ref[:, P:P + S] = p
    padded = pad_ref[...]                           # (C, S + 2P)

    # Column index within each pooled row -> masks for horizontal out-of-image taps.
    k_idx = lax.broadcasted_iota(jnp.int32, (C, S), 1) % w2
    mask_l = k_idx != 0          # tap reads column k-1: invalid where k == 0
    mask_r = k_idx != (w2 - 1)   # tap reads column k+1: invalid where k == w2-1

    acc = jnp.zeros((out_c, S), jnp.float32)
    t = 0
    for dy in (-1, 0, 1):
        for dx in (-1, 0, 1):
            off = P + dy * w2 + dx                  # static offset into padded row
            tap = padded[:, off:off + S]            # (C, S) shifted tap
            if dx == -1:
                tap = jnp.where(mask_l, tap, 0.0)
            elif dx == 1:
                tap = jnp.where(mask_r, tap, 0.0)
            # MXU: (out_c, C) @ (C, S), f32 accumulate.
            acc = acc + jnp.dot(w_ref[t], tap, preferred_element_type=jnp.float32)
            t += 1

    o_ref[0] = acc                                  # single lane-dense store


def fcsubnet_forward(x, conv4_weight):
    """x: (N, C, H, W) f32;  conv4_weight: (out_c, C, 3, 3) f32 (OIHW)."""
    N, C, H, W = x.shape
    out_c = conv4_weight.shape[0]
    h2, w2 = H // 2, W // 2
    S = h2 * w2

    # --- ReOrg: pure slicing / channel concat (data movement only) -> XLA glue ---
    pink = x[:, :, :h2, :w2]
    green = x[:, :, h2:, :w2]
    purple = x[:, :, :h2, w2:]
    red = x[:, :, h2:, w2:]
    reorg = jnp.concatenate([pink, green, purple, red], axis=1)   # (N, 4C, h2, w2)

    # --- MaxPool2d(2,2): one fused XLA reduce (reads x once, writes x/4) ---
    # TODO(synk): fuse this pooling step into the Pallas kernel.
    p3 = jnp.max(x.reshape(N, C, h2, 2, w2, 2), axis=(3, 5))      # (N, C, h2, w2)
    p3_flat = p3.reshape(N, C, S)                                  # free reshape

    # Per-tap (out_c, in_c) weight matrices, tap index = 3*kh + kw (tiny).
    w_taps = jnp.transpose(conv4_weight, (2, 3, 0, 1)).reshape(9, out_c, C)

    kernel = functools.partial(_conv3x3_kernel, C=C, h2=h2, w2=w2, out_c=out_c)

    flops = 2 * N * out_c * C * 9 * S
    bytes_accessed = 4 * (p3_flat.size + w_taps.size + N * out_c * S)

    c4_flat = pl.pallas_call(
        kernel,
        out_shape=jax.ShapeDtypeStruct((N, out_c, S), jnp.float32),
        grid_spec=pltpu.PrefetchScalarGridSpec(
            num_scalar_prefetch=0,
            grid=(N,),
            in_specs=[
                # Weights: constant block index -> resident in VMEM, fetched once.
                pl.BlockSpec((9, out_c, C), lambda n: (0, 0, 0)),
                # Activations: one batch element per grid step, pipelined.
                pl.BlockSpec((1, C, S), lambda n: (n, 0, 0)),
            ],
            out_specs=pl.BlockSpec((1, out_c, S), lambda n: (n, 0, 0)),
            scratch_shapes=[pltpu.VMEM((C, S + 2 * (w2 + 1)), jnp.float32)],
        ),
        compiler_params=pltpu.CompilerParams(
            dimension_semantics=("parallel",),
            vmem_limit_bytes=32 * 1024 * 1024,
        ),
        cost_estimate=pl.CostEstimate(
            flops=flops, transcendentals=0, bytes_accessed=bytes_accessed),
    )(w_taps, p3_flat)

    c4 = c4_flat.reshape(N, out_c, h2, w2)                         # free reshape
    return jnp.concatenate([reorg, c4], axis=1)                    # (N, 4C+out_c, h2, w2)


def _reference(x, conv4_weight):
    """Pure-JAX reference matching the PyTorch forward."""
    N, C, H, W = x.shape
    h2, w2 = H // 2, W // 2
    pink = x[:, :, :h2, :w2]
    green = x[:, :, h2:, :w2]
    purple = x[:, :, :h2, w2:]
    red = x[:, :, h2:, w2:]
    reorg = jnp.concatenate([pink, green, purple, red], axis=1)
    p3 = x.reshape(N, C, h2, 2, w2, 2).max(axis=(3, 5))
    c4 = lax.conv_general_dilated(
        p3, conv4_weight, window_strides=(1, 1), padding=((1, 1), (1, 1)),
        dimension_numbers=("NCHW", "OIHW", "NCHW"))
    return jnp.concatenate([reorg, c4], axis=1)


if __name__ == "__main__":
    N, C, H, W = 2, 4, 16, 16
    out_c = 8

    key = jax.random.PRNGKey(0)
    kx, kw = jax.random.split(key)
    x = jax.random.normal(kx, (N, C, H, W), dtype=jnp.float32)
    # Deterministic synthetic Conv2d weight, shape (out_c, in_c, 3, 3), no bias.
    conv4_weight = (jax.random.normal(kw, (out_c, C, 3, 3), dtype=jnp.float32)
                    * (1.0 / (C * 9) ** 0.5))

    fwd = jax.jit(fcsubnet_forward)
    out = jax.block_until_ready(fwd(x, conv4_weight))
    ref = jax.block_until_ready(_reference(x, conv4_weight))

    assert out.shape == (N, 4 * C + out_c, H // 2, W // 2), out.shape
    max_err = float(jnp.max(jnp.abs(out - ref)))
    assert jnp.allclose(out, ref, atol=1e-4, rtol=1e-4), max_err

    print("KERNEL_OK")
</pallas_src>

<mosaic_0001>
module attributes {stable_mosaic.version = 11 : i64} {
  func.func @_conv3x3_kernel(%arg0: i32, %arg1: memref<9x8x4xf32, #tpu.memory_space<vmem>>, %arg2: memref<1x4x64xf32, #tpu.memory_space<vmem>>, %arg3: memref<1x8x64xf32, #tpu.memory_space<vmem>>, %arg4: memref<4x82xf32, #tpu.memory_space<vmem>>) attributes {dimension_semantics = [#tpu.dimension_semantics<parallel>], iteration_bounds = array<i64: 2>, scalar_prefetch = 0 : i64, scratch_operands = 1 : i64, tpu.core_type = #tpu.core_type<tc>, window_params = [{pipeline_mode = #tpu.pipeline_mode<synchronous>, transform_indices = @transform_0, window_bounds = array<i64: 9, 8, 4>}, {transform_indices = @transform_1, window_bounds = array<i64: 1, 4, 64>}, {transform_indices = @transform_2, window_bounds = array<i64: 1, 8, 64>}]} {
    %c0 = arith.constant 0 : index
    %c0_0 = arith.constant 0 : index
    %c0_1 = arith.constant 0 : index
    %0 = vector.load %arg2[%c0, %c0_0, %c0_1] : memref<1x4x64xf32, #tpu.memory_space<vmem>>, vector<1x4x64xf32>
    %1 = vector.shape_cast %0 : vector<1x4x64xf32> to vector<4x64xf32>
    %cst = arith.constant 0.000000e+00 : f32
    %2 = vector.broadcast %cst : f32 to vector<4x82xf32>
    %c0_2 = arith.constant 0 : index
    %c0_3 = arith.constant 0 : index
    %3 = vector.load %arg4[%c0_2, %c0_3] : memref<4x82xf32, #tpu.memory_space<vmem>>, vector<4x82xf32>
    tpu.vector_store %arg4[%c0_2, %c0_3], %2 {strides = array<i32>} : memref<4x82xf32, #tpu.memory_space<vmem>>, vector<4x82xf32>,
    %c0_4 = arith.constant 0 : index
    %c9 = arith.constant 9 : index
    %4 = vector.load %arg4[%c0_4, %c9] : memref<4x82xf32, #tpu.memory_space<vmem>>, vector<4x64xf32>
    tpu.vector_store %arg4[%c0_4, %c9], %1 {strides = array<i32>} : memref<4x82xf32, #tpu.memory_space<vmem>>, vector<4x64xf32>,
    %c0_5 = arith.constant 0 : index
    %c0_6 = arith.constant 0 : index
    %5 = vector.load %arg4[%c0_5, %c0_6] : memref<4x82xf32, #tpu.memory_space<vmem>>, vector<4x82xf32>
    %6 = tpu.iota {dimensions = array<i32: 1>} : vector<4x64xi32>
    %c8_i32 = arith.constant 8 : i32
    %c0_i32 = arith.constant 0 : i32
    %7 = arith.cmpi eq, %c8_i32, %c0_i32 : i32
    %c1_i32 = arith.constant 1 : i32
    %8 = arith.select %7, %c1_i32, %c8_i32 : i32
    %9 = vector.broadcast %8 : i32 to vector<4x64xi32>
    %10 = arith.remsi %6, %9 : vector<4x64xi32>
    %c0_i32_7 = arith.constant 0 : i32
    %11 = vector.broadcast %c0_i32_7 : i32 to vector<4x64xi32>
    %12 = arith.cmpi ne, %10, %11 : vector<4x64xi32>
    %c0_i32_8 = arith.constant 0 : i32
    %13 = vector.broadcast %c0_i32_8 : i32 to vector<4x64xi32>
    %14 = arith.cmpi slt, %10, %13 : vector<4x64xi32>
    %c0_i32_9 = arith.constant 0 : i32
    %15 = arith.cmpi slt, %8, %c0_i32_9 : i32
    %16 = vector.broadcast %15 : i1 to vector<4x64xi1>
    %17 = vector.broadcast %16 : vector<4x64xi1> to vector<4x64xi1>
    %18 = arith.xori %14, %17 : vector<4x64xi1>
    %19 = arith.andi %18, %12 : vector<4x64xi1>
    %20 = vector.broadcast %8 : i32 to vector<4x64xi32>
    %21 = arith.addi %10, %20 : vector<4x64xi32>
    %22 = arith.select %19, %21, %10 : vector<4x64xi1>, vector<4x64xi32>
    %c0_i32_10 = arith.constant 0 : i32
    %23 = vector.broadcast %c0_i32_10 : i32 to vector<4x64xi32>
    %24 = arith.cmpi ne, %22, %23 : vector<4x64xi32>
    %c7_i32 = arith.constant 7 : i32
    %25 = vector.broadcast %c7_i32 : i32 to vector<4x64xi32>
    %26 = arith.cmpi ne, %22, %25 : vector<4x64xi32>
    %cst_11 = arith.constant 0.000000e+00 : f32
    %27 = vector.broadcast %cst_11 : f32 to vector<8x64xf32>
    %28 = vector.extract_strided_slice %5 {offsets = [0, 0], sizes = [4, 64], strides = [1, 1]} : vector<4x82xf32> to vector<4x64xf32>
    %cst_12 = arith.constant 0.000000e+00 : f32
    %29 = vector.broadcast %cst_12 : f32 to vector<4x64xf32>
    %30 = arith.select %24, %28, %29 : vector<4x64xi1>, vector<4x64xf32>
    %c0_13 = arith.constant 0 : index
    %c0_14 = arith.constant 0 : index
    %c0_15 = arith.constant 0 : index
    %31 = vector.load %arg1[%c0_13, %c0_14, %c0_15] : memref<9x8x4xf32, #tpu.memory_space<vmem>>, vector<1x8x4xf32>
    %32 = vector.shape_cast %31 : vector<1x8x4xf32> to vector<8x4xf32>
    %cst_16 = arith.constant dense<0.000000e+00> : vector<8x64xf32>
    %33 = tpu.matmul %32, %30, %cst_16 {dimension_numbers = #tpu.dot_dimension_numbers<[1], [0], [0], [1], [0, 0, 1, 1], [], []>} : vector<8x4xf32>, vector<4x64xf32>, vector<8x64xf32> -> vector<8x64xf32>
    %34 = arith.addf %27, %33 : vector<8x64xf32>
    %35 = vector.extract_strided_slice %5 {offsets = [0, 1], sizes = [4, 64], strides = [1, 1]} : vector<4x82xf32> to vector<4x64xf32>
    %c1 = arith.constant 1 : index
    %c0_17 = arith.constant 0 : index
    %c0_18 = arith.constant 0 : index
    %36 = vector.load %arg1[%c1, %c0_17, %c0_18] : memref<9x8x4xf32, #tpu.memory_space<vmem>>, vector<1x8x4xf32>
    %37 = vector.shape_cast %36 : vector<1x8x4xf32> to vector<8x4xf32>
    %cst_19 = arith.constant dense<0.000000e+00> : vector<8x64xf32>
    %38 = tpu.matmul %37, %35, %cst_19 {dimension_numbers = #tpu.dot_dimension_numbers<[1], [0], [0], [1], [0, 0, 1, 1], [], []>} : vector<8x4xf32>, vector<4x64xf32>, vector<8x64xf32> -> vector<8x64xf32>
    %39 = arith.addf %34, %38 : vector<8x64xf32>
    %40 = vector.extract_strided_slice %5 {offsets = [0, 2], sizes = [4, 64], strides = [1, 1]} : vector<4x82xf32> to vector<4x64xf32>
    %cst_20 = arith.constant 0.000000e+00 : f32
    %41 = vector.broadcast %cst_20 : f32 to vector<4x64xf32>
    %42 = arith.select %26, %40, %41 : vector<4x64xi1>, vector<4x64xf32>
    %c2 = arith.constant 2 : index
    %c0_21 = arith.constant 0 : index
    %c0_22 = arith.constant 0 : index
    %43 = vector.load %arg1[%c2, %c0_21, %c0_22] : memref<9x8x4xf32, #tpu.memory_space<vmem>>, vector<1x8x4xf32>
    %44 = vector.shape_cast %43 : vector<1x8x4xf32> to vector<8x4xf32>
    %cst_23 = arith.constant dense<0.000000e+00> : vector<8x64xf32>
    %45 = tpu.matmul %44, %42, %cst_23 {dimension_numbers = #tpu.dot_dimension_numbers<[1], [0], [0], [1], [0, 0, 1, 1], [], []>} : vector<8x4xf32>, vector<4x64xf32>, vector<8x64xf32> -> vector<8x64xf32>
    %46 = arith.addf %39, %45 : vector<8x64xf32>
    %47 = vector.extract_strided_slice %5 {offsets = [0, 8], sizes = [4, 64], strides = [1, 1]} : vector<4x82xf32> to vector<4x64xf32>
    %cst_24 = arith.constant 0.000000e+00 : f32
    %48 = vector.broadcast %cst_24 : f32 to vector<4x64xf32>
    %49 = arith.select %24, %47, %48 : vector<4x64xi1>, vector<4x64xf32>
    %c3 = arith.constant 3 : index
    %c0_25 = arith.constant 0 : index
    %c0_26 = arith.constant 0 : index
    %50 = vector.load %arg1[%c3, %c0_25, %c0_26] : memref<9x8x4xf32, #tpu.memory_space<vmem>>, vector<1x8x4xf32>
    %51 = vector.shape_cast %50 : vector<1x8x4xf32> to vector<8x4xf32>
    %cst_27 = arith.constant dense<0.000000e+00> : vector<8x64xf32>
    %52 = tpu.matmul %51, %49, %cst_27 {dimension_numbers = #tpu.dot_dimension_numbers<[1], [0], [0], [1], [0, 0, 1, 1], [], []>} : vector<8x4xf32>, vector<4x64xf32>, vector<8x64xf32> -> vector<8x64xf32>
    %53 = arith.addf %46, %52 : vector<8x64xf32>
    %54 = vector.extract_strided_slice %5 {offsets = [0, 9], sizes = [4, 64], strides = [1, 1]} : vector<4x82xf32> to vector<4x64xf32>
    %c4 = arith.constant 4 : index
    %c0_28 = arith.constant 0 : index
    %c0_29 = arith.constant 0 : index
    %55 = vector.load %arg1[%c4, %c0_28, %c0_29] : memref<9x8x4xf32, #tpu.memory_space<vmem>>, vector<1x8x4xf32>
    %56 = vector.shape_cast %55 : vector<1x8x4xf32> to vector<8x4xf32>
    %cst_30 = arith.constant dense<0.000000e+00> : vector<8x64xf32>
    %57 = tpu.matmul %56, %54, %cst_30 {dimension_numbers = #tpu.dot_dimension_numbers<[1], [0], [0], [1], [0, 0, 1, 1], [], []>} : vector<8x4xf32>, vector<4x64xf32>, vector<8x64xf32> -> vector<8x64xf32>
    %58 = arith.addf %53, %57 : vector<8x64xf32>
    %59 = vector.extract_strided_slice %5 {offsets = [0, 10], sizes = [4, 64], strides = [1, 1]} : vector<4x82xf32> to vector<4x64xf32>
    %cst_31 = arith.constant 0.000000e+00 : f32
    %60 = vector.broadcast %cst_31 : f32 to vector<4x64xf32>
    %61 = arith.select %26, %59, %60 : vector<4x64xi1>, vector<4x64xf32>
    %c5 = arith.constant 5 : index
    %c0_32 = arith.constant 0 : index
    %c0_33 = arith.constant 0 : index
    %62 = vector.load %arg1[%c5, %c0_32, %c0_33] : memref<9x8x4xf32, #tpu.memory_space<vmem>>, vector<1x8x4xf32>
    %63 = vector.shape_cast %62 : vector<1x8x4xf32> to vector<8x4xf32>
    %cst_34 = arith.constant dense<0.000000e+00> : vector<8x64xf32>
    %64 = tpu.matmul %63, %61, %cst_34 {dimension_numbers = #tpu.dot_dimension_numbers<[1], [0], [0], [1], [0, 0, 1, 1], [], []>} : vector<8x4xf32>, vector<4x64xf32>, vector<8x64xf32> -> vector<8x64xf32>
    %65 = arith.addf %58, %64 : vector<8x64xf32>
    %66 = vector.extract_strided_slice %5 {offsets = [0, 16], sizes = [4, 64], strides = [1, 1]} : vector<4x82xf32> to vector<4x64xf32>
    %cst_35 = arith.constant 0.000000e+00 : f32
    %67 = vector.broadcast %cst_35 : f32 to vector<4x64xf32>
    %68 = arith.select %24, %66, %67 : vector<4x64xi1>, vector<4x64xf32>
    %c6 = arith.constant 6 : index
    %c0_36 = arith.constant 0 : index
    %c0_37 = arith.constant 0 : index
    %69 = vector.load %arg1[%c6, %c0_36, %c0_37] : memref<9x8x4xf32, #tpu.memory_space<vmem>>, vector<1x8x4xf32>
    %70 = vector.shape_cast %69 : vector<1x8x4xf32> to vector<8x4xf32>
    %cst_38 = arith.constant dense<0.000000e+00> : vector<8x64xf32>
    %71 = tpu.matmul %70, %68, %cst_38 {dimension_numbers = #tpu.dot_dimension_numbers<[1], [0], [0], [1], [0, 0, 1, 1], [], []>} : vector<8x4xf32>, vector<4x64xf32>, vector<8x64xf32> -> vector<8x64xf32>
    %72 = arith.addf %65, %71 : vector<8x64xf32>
    %73 = vector.extract_strided_slice %5 {offsets = [0, 17], sizes = [4, 64], strides = [1, 1]} : vector<4x82xf32> to vector<4x64xf32>
    %c7 = arith.constant 7 : index
    %c0_39 = arith.constant 0 : index
    %c0_40 = arith.constant 0 : index
    %74 = vector.load %arg1[%c7, %c0_39, %c0_40] : memref<9x8x4xf32, #tpu.memory_space<vmem>>, vector<1x8x4xf32>
    %75 = vector.shape_cast %74 : vector<1x8x4xf32> to vector<8x4xf32>
    %cst_41 = arith.constant dense<0.000000e+00> : vector<8x64xf32>
    %76 = tpu.matmul %75, %73, %cst_41 {dimension_numbers = #tpu.dot_dimension_numbers<[1], [0], [0], [1], [0, 0, 1, 1], [], []>} : vector<8x4xf32>, vector<4x64xf32>, vector<8x64xf32> -> vector<8x64xf32>
    %77 = arith.addf %72, %76 : vector<8x64xf32>
    %78 = vector.extract_strided_slice %5 {offsets = [0, 18], sizes = [4, 64], strides = [1, 1]} : vector<4x82xf32> to vector<4x64xf32>
    %cst_42 = arith.constant 0.000000e+00 : f32
    %79 = vector.broadcast %cst_42 : f32 to vector<4x64xf32>
    %80 = arith.select %26, %78, %79 : vector<4x64xi1>, vector<4x64xf32>
    %c8 = arith.constant 8 : index
    %c0_43 = arith.constant 0 : index
    %c0_44 = arith.constant 0 : index
    %81 = vector.load %arg1[%c8, %c0_43, %c0_44] : memref<9x8x4xf32, #tpu.memory_space<vmem>>, vector<1x8x4xf32>
    %82 = vector.shape_cast %81 : vector<1x8x4xf32> to vector<8x4xf32>
    %cst_45 = arith.constant dense<0.000000e+00> : vector<8x64xf32>
    %83 = tpu.matmul %82, %80, %cst_45 {dimension_numbers = #tpu.dot_dimension_numbers<[1], [0], [0], [1], [0, 0, 1, 1], [], []>} : vector<8x4xf32>, vector<4x64xf32>, vector<8x64xf32> -> vector<8x64xf32>
    %84 = arith.addf %77, %83 : vector<8x64xf32>
    %c0_46 = arith.constant 0 : index
    %c0_47 = arith.constant 0 : index
    %c0_48 = arith.constant 0 : index
    %85 = vector.load %arg3[%c0_46, %c0_47, %c0_48] : memref<1x8x64xf32, #tpu.memory_space<vmem>>, vector<1x8x64xf32>
    %86 = vector.shape_cast %85 : vector<1x8x64xf32> to vector<8x64xf32>
    %87 = vector.shape_cast %84 : vector<8x64xf32> to vector<1x8x64xf32>
    tpu.vector_store %arg3[%c0_46, %c0_47, %c0_48], %87 {strides = array<i32>} : memref<1x8x64xf32, #tpu.memory_space<vmem>>, vector<1x8x64xf32>,
    return
  }
  func.func @transform_0(%arg0: i32) -> (i32, i32, i32) {
    %c0_i32 = arith.constant 0 : i32
    %c0_i32_0 = arith.constant 0 : i32
    %c0_i32_1 = arith.constant 0 : i32
    %c0_i32_2 = arith.constant 0 : i32
    return %c0_i32, %c0_i32_0, %c0_i32_1 : i32, i32, i32
  }
  func.func @transform_1(%arg0: i32) -> (i32, i32, i32) {
    %c0_i32 = arith.constant 0 : i32
    %c0_i32_0 = arith.constant 0 : i32
    %c0_i32_1 = arith.constant 0 : i32
    return %arg0, %c0_i32, %c0_i32_0 : i32, i32, i32
  }
  func.func @transform_2(%arg0: i32) -> (i32, i32, i32) {
    %c0_i32 = arith.constant 0 : i32
    %c0_i32_0 = arith.constant 0 : i32
    %c0_i32_1 = arith.constant 0 : i32
    return %arg0, %c0_i32, %c0_i32_0 : i32, i32, i32
  }
}

</mosaic_0001>

<llo_original>
// kernel: fcsubnet_forward.1
$region0: #{fcsubnet_forward.1}
  #allocation0 [shape = 'u32[]', space=smem, size = 0x4, offset = 0x4, fixed_abs, tag = 'smem constant byte address 0x4 - core index']
  #allocation1 [shape = 'u32[144,128]{1,0:T(1,128)}', space=vmem, size = 0x12000, scoped, tag = 'internal scratch']
  #allocation2 [shape = 'f32[4,82]{1,0:T(4,128)}', space=vmem, size = 0x800, scoped, tag = 'scratch operand']
  %s0 = inlined_call_operand.vmem [shape: f32[9,8,4], index: 0, kind: input, shape index: {}]
  %s1 = inlined_call_operand.vmem [shape: f32[2,4,64], index: 1, kind: input, shape index: {}]
  %s2 = inlined_call_operand.vmem [shape: f32[2,8,64], index: 2, kind: output, shape index: {}]
  %s3 = sld [smem:[#allocation0]]
  $region41: #{fcsubnet_forward.1} parent=0
    _
  %s5 = ssub.s32 1, %s3
  %s6 = scalar_select 0, %s5, %s3
  loop: start=0, step=1, limit=4
  $region2: #{fcsubnet_forward.1} parent=0 // loop_pre_header
    _
  $region3: #{fcsubnet_forward.1} parent=0 // loop_header
    %s8 = sphi 0, %s12
    %p9 = scmp.ge.s32.totalorder %s8, 4
    %s16 = sphi 0, %s16
    %s18 = sphi 0, %s16
    %s19 = sphi 0, %s18
    %s33 = sphi 0, %s19
    %s39 = sphi 0, %s41
    %s42 = sphi 0, %s39
    %s43 = sphi 0, %s42
    %s59 = sphi 0, %s43
    %s65 = sphi 0, %s67
    %s68 = sphi 0, %s65
    %s69 = sphi 0, %s68
    %s85 = sphi 0, %s69
  $region4: #{fcsubnet_forward.1} parent=0 // loop_header_branch
    %11 = sbr.rel (%p9) target = $region8
  $region5: #{fcsubnet_forward.1} parent=0 // loop_body
    %s13 = ssub.s32 %s8, 1
    %s14 = ssub.s32 %s8, 2
    %s15 = sadd.s32 %s8, 1
    %s17 = sadd.s32 %s16, 1
    %p20 = scmp.eq.s32.totalorder %s8, 1
    %p21 = scmp.ne.s32.totalorder %s16, %s18
    %p22 = scmp.eq.s32.totalorder %s8, 0
    %p23 = por %p21, %p22
    %p24 = scmp.ne.s32.totalorder %s16, %s18
    %p25 = scmp.eq.s32.totalorder %s13, 1
    %p26 = por %p24, %p25
    %p27 = scmp.ne.s32.totalorder %s18, %s19
    %p28 = scmp.eq.s32.totalorder %s13, 0
    %p29 = por %p27, %p28
    %p30 = scmp.ne.s32.totalorder %s18, %s19
    %p31 = scmp.eq.s32.totalorder %s14, 1
    %p32 = por %p30, %p31
    %p34 = scmp.ne.s32.totalorder %s19, %s33
    %p35 = scmp.eq.s32.totalorder %s14, 0
    %p36 = por %p34, %p35
    %s37 = ssub.s32 %s8, %s15
    %p38 = scmp.eq.s32.totalorder %s37, 0
    %s40 = sadd.s32 %s39, 1
    %s41 = scalar_select %p38, %s39, %s40
    %p44 = pneg %p38
    %p45 = scmp.eq.s32.totalorder %s8, 1
    %p46 = por %p44, %p45
    %p47 = scmp.ne.s32.totalorder %s39, %s42
    %p48 = scmp.eq.s32.totalorder %s8, 0
    %p49 = por %p47, %p48
    %p50 = scmp.ne.s32.totalorder %s39, %s42
    %p51 = scmp.eq.s32.totalorder %s13, 1
    %p52 = por %p50, %p51
    %p53 = scmp.ne.s32.totalorder %s42, %s43
    %p54 = scmp.eq.s32.totalorder %s13, 0
    %p55 = por %p53, %p54
    %p56 = scmp.ne.s32.totalorder %s42, %s43
    %p57 = scmp.eq.s32.totalorder %s14, 1
    %p58 = por %p56, %p57
    %p60 = scmp.ne.s32.totalorder %s43, %s59
    %p61 = scmp.eq.s32.totalorder %s14, 0
    %p62 = por %p60, %p61
    %s63 = ssub.s32 %s8, %s15
    %p64 = scmp.eq.s32.totalorder %s63, 0
    %s66 = sadd.s32 %s65, 1
    %s67 = scalar_select %p64, %s65, %s66
    %p70 = pneg %p64
    %p71 = scmp.eq.s32.totalorder %s8, 1
    %p72 = por %p70, %p71
    %p73 = scmp.ne.s32.totalorder %s65, %s68
    %p74 = scmp.eq.s32.totalorder %s8, 0
    %p75 = por %p73, %p74
    %p76 = scmp.ne.s32.totalorder %s65, %s68
    %p77 = scmp.eq.s32.totalorder %s13, 1
    %p78 = por %p76, %p77
    %p79 = scmp.ne.s32.totalorder %s68, %s69
    %p80 = scmp.eq.s32.totalorder %s13, 0
    %p81 = por %p79, %p80
    %p82 = scmp.ne.s32.totalorder %s68, %s69
    %p83 = scmp.eq.s32.totalorder %s14, 1
    %p84 = por %p82, %p83
    %p86 = scmp.ne.s32.totalorder %s69, %s85
    %p87 = scmp.eq.s32.totalorder %s14, 0
    %p88 = por %p86, %p87
    %p89 = scmp.le.s32.totalorder 1, %s8
    %p90 = scmp.lt.s32.totalorder %s8, 3
    %p91 = pnand %p89, %p90
    %p92 = pneg %p91
    // Predicated region
    $region9: #{fcsubnet_forward.1} parent=5 // pred_check
      _
    $region10: #{fcsubnet_forward.1} parent=5 // pred_check_branch
      %94 = sbr.rel (%p91) target = $region12
    $region11: #{fcsubnet_forward.1} parent=5 // pred_region
      %s95 = ssub.s32 %s8, 1
      // Predicated region
      $region13: #{fcsubnet_forward.1} parent=11 // pred_check
        %p96 = pneg %p29
      $region14: #{fcsubnet_forward.1} parent=11 // pred_check_branch
        %98 = sbr.rel (%p96) target = $region16
      $region15: #{fcsubnet_forward.1} parent=11 // pred_region
        _
      $region16: #{fcsubnet_forward.1} parent=11 // pred_fallthru
        _
    $region12: #{fcsubnet_forward.1} parent=5 // pred_fallthru
      _
    %p99 = scmp.lt.s32.totalorder %s8, 2
    // Predicated region
    $region17: #{fcsubnet_forward.1} parent=5 // pred_check
      %p100 = pneg %p99
    $region18: #{fcsubnet_forward.1} parent=5 // pred_check_branch
      %102 = sbr.rel (%p100) target = $region20
    $region19: #{fcsubnet_forward.1} parent=5 // pred_region
      // Predicated region
      $region21: #{fcsubnet_forward.1} parent=19 // pred_check
        %p103 = pneg %p49
      $region22: #{fcsubnet_forward.1} parent=19 // pred_check_branch
        %105 = sbr.rel (%p103) target = $region24
      $region23: #{fcsubnet_forward.1} parent=19 // pred_region
        %p106 = scmp.lt.s32.totalorder %s8, 1
        %s107 = scalar_select %p106, %s8, 1
        %s108 = smul.addr %s107, 4
        %s109 = scalar_lea.vmem %s1, %s108
      $region24: #{fcsubnet_forward.1} parent=19 // pred_fallthru
        _
    $region20: #{fcsubnet_forward.1} parent=5 // pred_fallthru
      _
    %p110 = scmp.le.s32.totalorder 1, %s8
    %p111 = scmp.lt.s32.totalorder %s8, 3
    %p112 = pnand %p110, %p111
    %p113 = pneg %p112
    // Predicated region
    $region25: #{fcsubnet_forward.1} parent=5 // pred_check
      _
    $region26: #{fcsubnet_forward.1} parent=5 // pred_check_branch
      %115 = sbr.rel (%p112) target = $region28
    $region27: #{fcsubnet_forward.1} parent=5 // pred_region
      %s116 = ssub.s32 %s8, 1
      %p117 = pneg %p29
      %p118 = pneg %p26
      %p119 = scmp.lt.s32.totalorder %s13, 1
      %s120 = scalar_select %p119, %s13, 1
      %s121 = smul.addr %s120, 4
      %s122 = scalar_lea.vmem %s1, %s121
      %p123 = pneg %p55
      %p124 = pneg %p52
      %p125 = pneg %p81
      %p126 = pneg %p78
      %p127 = scmp.lt.s32.totalorder %s13, 1
      %s128 = scalar_select %p127, %s13, 1
      %s129 = smul.addr %s128, 8
      %s130 = scalar_lea.vmem %s2, %s129
      %p131 = scmp.lt.s32.totalorder %s13, 1
      %s132 = scalar_select %p131, %s13, 1
      %s133 = smul.addr %s132, 4
      %s134 = scalar_lea.vmem %s1, %s133
      %p135 = scmp.lt.s32.totalorder %s13, 1
      %s136 = scalar_select %p135, %s13, 1
      %s137 = smul.addr %s136, 8
      %s138 = scalar_lea.vmem %s2, %s137
      %v139 = vld [vmem:[%s134] sm:$0xf]
      %vm140 = vcmask 666624
      %141 = vst.msk [vmem:[#allocation2] sm:$0xf] %vm140, 0.0
      %143 = vrot.lane.b32.xlu0 %v139, 9
      %v144 = vpop.permute.xlu0 %143
      %vm146 = vcmask 592968
      %147 = vst.msk [vmem:[#allocation2] sm:$0xf] %vm146, %v144
      %v148 = vld [vmem:[#allocation2] sm:$0xf]
      %v149 = vlaneseq
      %v150 = vand.u32 %v149, 127
      %vm151 = vcmp.lt.s32.totalorder %v150, 0
      %v152 = vsub.s32 0, %v150
      %v153 = vsel %vm151, %v152, %v150
      %v154 = vshrl.u32 %v153, 3
      %v155 = vand.u32 %v153, 7
      %v156 = vsub.s32 0, %v155
      %v157 = vsel %vm151, %v156, %v155
      %vm158 = vcmp.ne.s32.totalorder %v157, 0
      %vm159 = vcmp.lt.s32.totalorder %v157, 0
      %vm160 = vmand %vm159, %vm158
      %v161 = vadd.s32 %v157, 8
      %v162 = vsel %vm160, %v161, %v157
      %vm163 = vcmp.ne.s32.totalorder %v162, 0
      %vm164 = vcmp.ne.s32.totalorder %v162, 7
      %v165 = vsel %vm163, %v148, 0.0
      %v166 = vld [vmem:[%s0] sm:$0xff]
      %s167 = scalar_lea.vmem %s0, 8
      %v168 = vld [vmem:[%s167] sm:$0xff]
      %170 = vrot.lane.b32.xlu0 %v148, 127
      %v171 = vpop.permute.xlu0 %170
      %vm172 = vcmask 31744
      %v174 = vsel %vm172, %v168, 0
      %vm176 = vcmask 1043456
      %v177 = vsel %vm176, %v171, 0
      %179 = vmatprep.subr.mxu0 0.0
      %180 = vmatpush1.msra.mxu0 0.0
      %181 = vmatprep.subr.mxu0 0.0
      %182 = vmatpush1.msra.mxu0 0.0
      %183 = vmatprep.subr.mxu0 0.0
      %184 = vmatpush1.msra.mxu0 0.0
      %185 = vmatprep.subr.mxu0 0.0
      %186 = vmatpush1.msra.mxu0 0.0
      %187 = vmatprep.subr.mxu0 0.0
      %188 = vmatpush1.msra.mxu0 0.0
      %189 = vmatprep.subr.mxu0 0.0
      %190 = vmatpush1.msra.mxu0 0.0
      %191 = vmatprep.subr.mxu0 0.0
      %192 = vmatpush1.msra.mxu0 0.0
      %193 = vmatprep.subr.mxu0 0.0
      %194 = vmatpush1.msra.mxu0 0.0
      %195 = vmatprep.subr.mxu0 0.0
      %196 = vmatpush1.msra.mxu0 0.0
      %197 = vmatprep.subr.mxu0 0.0
      %198 = vmatpush1.msra.mxu0 0.0
      %199 = vmatprep.subr.mxu0 0.0
      %200 = vmatpush1.msra.mxu0 0.0
      %201 = vmatprep.subr.mxu0 0.0
      %202 = vmatpush1.msra.mxu0 0.0
      %203 = vmatprep.subr.mxu0 0.0
      %204 = vmatpush1.msra.mxu0 0.0
      %205 = vmatprep.subr.mxu0 0.0
      %206 = vmatpush1.msra.mxu0 0.0
      %207 = vmatprep.subr.mxu0 0.0
      %208 = vmatpush1.msra.mxu0 0.0
      %209 = vmatprep.subr.mxu0 0.0
      %210 = vmatpush1.msra.mxu0 %v177
      %211 = vmatprep.subr.mxu0 0.0
      %212 = vmatpush2.msra.mxu0 0.0
      %213 = vmatprep.subr.mxu0 0.0
      %214 = vmatpush2.msra.mxu0 0.0
      %215 = vmatprep.subr.mxu0 0.0
      %216 = vmatpush2.msra.mxu0 0.0
      %217 = vmatprep.subr.mxu0 0.0
      %218 = vmatpush2.msra.mxu0 0.0
      %219 = vmatprep.subr.mxu0 0.0
      %220 = vmatpush2.msra.mxu0 0.0
      %221 = vmatprep.subr.mxu0 0.0
      %222 = vmatpush2.msra.mxu0 0.0
      %223 = vmatprep.subr.mxu0 0.0
      %224 = vmatpush2.msra.mxu0 0.0
      %225 = vmatprep.subr.mxu0 0.0
      %226 = vmatpush2.msra.mxu0 0.0
      %227 = vmatprep.subr.mxu0 0.0
      %228 = vmatpush2.msra.mxu0 0.0
      %229 = vmatprep.subr.mxu0 0.0
      %230 = vmatpush2.msra.mxu0 0.0
      %231 = vmatprep.subr.mxu0 0.0
      %232 = vmatpush2.msra.mxu0 0.0
      %233 = vmatprep.subr.mxu0 0.0
      %234 = vmatpush2.msra.mxu0 0.0
      %235 = vmatprep.subr.mxu0 0.0
      %236 = vmatpush2.msra.mxu0 0.0
      %237 = vmatprep.subr.mxu0 0.0
      %238 = vmatpush2.msra.mxu0 0.0
      %239 = vmatprep.subr.mxu0 0.0
      %240 = vmatpush2.msra.mxu0 0.0
      %241 = vmatprep.subr.mxu0 0.0
      %242 = vmatpush2.msra.mxu0 0.0
      %243 = vmatprep.mubr.f32.mxu0 0.0
      %244 = vmatmul.mubr.f32.gmra.mxu0 %v174
      %v245 = vpop.f32.mrf.mxu0
      %v246 = vadd.f32 0.0, %v245
      %v247 = vpop.f32.mrf.mxu0
      %248 = vdwg.mxu0
      %v250 = vsel %vm172, %v166, 0
      %v253 = vsel %vm176, %v165, 0
      %255 = vmatprep.subr.mxu0 0.0
      %256 = vmatpush1.msra.mxu0 0.0
      %257 = vmatprep.subr.mxu0 0.0
      %258 = vmatpush1.msra.mxu0 0.0
      %259 = vmatprep.subr.mxu0 0.0
      %260 = vmatpush1.msra.mxu0 0.0
      %261 = vmatprep.subr.mxu0 0.0
      %262 = vmatpush1.msra.mxu0 0.0
      %263 = vmatprep.subr.mxu0 0.0
      %264 = vmatpush1.msra.mxu0 0.0
      %265 = vmatprep.subr.mxu0 0.0
      %266 = vmatpush1.msra.mxu0 0.0
      %267 = vmatprep.subr.mxu0 0.0
      %268 = vmatpush1.msra.mxu0 0.0
      %269 = vmatprep.subr.mxu0 0.0
      %270 = vmatpush1.msra.mxu0 0.0
      %271 = vmatprep.subr.mxu0 0.0
      %272 = vmatpush1.msra.mxu0 0.0
      %273 = vmatprep.subr.mxu0 0.0
      %274 = vmatpush1.msra.mxu0 0.0
      %275 = vmatprep.subr.mxu0 0.0
      %276 = vmatpush1.msra.mxu0 0.0
      %277 = vmatprep.subr.mxu0 0.0
      %278 = vmatpush1.msra.mxu0 0.0
      %279 = vmatprep.subr.mxu0 0.0
      %280 = vmatpush1.msra.mxu0 0.0
      %281 = vmatprep.subr.mxu0 0.0
      %282 = vmatpush1.msra.mxu0 0.0
      %283 = vmatprep.subr.mxu0 0.0
      %284 = vmatpush1.msra.mxu0 0.0
      %285 = vmatprep.subr.mxu0 0.0
      %286 = vmatpush1.msra.mxu0 %v253
      %287 = vmatprep.subr.mxu0 0.0
      %288 = vmatpush2.msra.mxu0 0.0
      %289 = vmatprep.subr.mxu0 0.0
      %290 = vmatpush2.msra.mxu0 0.0
      %291 = vmatprep.subr.mxu0 0.0
      %292 = vmatpush2.msra.mxu0 0.0
      %293 = vmatprep.subr.mxu0 0.0
      %294 = vmatpush2.msra.mxu0 0.0
      %295 = vmatprep.subr.mxu0 0.0
      %296 = vmatpush2.msra.mxu0 0.0
      %297 = vmatprep.subr.mxu0 0.0
      %298 = vmatpush2.msra.mxu0 0.0
      %299 = vmatprep.subr.mxu0 0.0
      %300 = vmatpush2.msra.mxu0 0.0
      %301 = vmatprep.subr.mxu0 0.0
      %302 = vmatpush2.msra.mxu0 0.0
      %303 = vmatprep.subr.mxu0 0.0
      %304 = vmatpush2.msra.mxu0 0.0
      %305 = vmatprep.subr.mxu0 0.0
      %306 = vmatpush2.msra.mxu0 0.0
      %307 = vmatprep.subr.mxu0 0.0
      %308 = vmatpush2.msra.mxu0 0.0
      %309 = vmatprep.subr.mxu0 0.0
      %310 = vmatpush2.msra.mxu0 0.0
      %311 = vmatprep.subr.mxu0 0.0
      %312 = vmatpush2.msra.mxu0 0.0
      %313 = vmatprep.subr.mxu0 0.0
      %314 = vmatpush2.msra.mxu0 0.0
      %315 = vmatprep.subr.mxu0 0.0
      %316 = vmatpush2.msra.mxu0 0.0
      %317 = vmatprep.subr.mxu0 0.0
      %318 = vmatpush2.msra.mxu0 0.0
      %319 = vmatprep.mubr.f32.mxu0 0.0
      %320 = vmatmul.mubr.f32.gmra.mxu0 %v250
      %v321 = vpop.f32.mrf.mxu0
      %v322 = vadd.f32 %v246, %v321
      %v323 = vpop.f32.mrf.mxu0
      %324 = vdwg.mxu0
      %325 = vrot.lane.b32.xlu0 %v148, 126
      %v326 = vpop.permute.xlu0 %325
      %v328 = vsel %vm164, %v326, 0.0
      %s329 = scalar_lea.vmem %s0, 16
      %v330 = vld [vmem:[%s329] sm:$0xff]
      %v332 = vsel %vm172, %v330, 0
      %v335 = vsel %vm176, %v328, 0
      %337 = vmatprep.subr.mxu0 0.0
      %338 = vmatpush1.msra.mxu0 0.0
      %339 = vmatprep.subr.mxu0 0.0
      %340 = vmatpush1.msra.mxu0 0.0
      %341 = vmatprep.subr.mxu0 0.0
      %342 = vmatpush1.msra.mxu0 0.0
      %343 = vmatprep.subr.mxu0 0.0
      %344 = vmatpush1.msra.mxu0 0.0
      %345 = vmatprep.subr.mxu0 0.0
      %346 = vmatpush1.msra.mxu0 0.0
      %347 = vmatprep.subr.mxu0 0.0
      %348 = vmatpush1.msra.mxu0 0.0
      %349 = vmatprep.subr.mxu0 0.0
      %350 = vmatpush1.msra.mxu0 0.0
      %351 = vmatprep.subr.mxu0 0.0
      %352 = vmatpush1.msra.mxu0 0.0
      %353 = vmatprep.subr.mxu0 0.0
      %354 = vmatpush1.msra.mxu0 0.0
      %355 = vmatprep.subr.mxu0 0.0
      %356 = vmatpush1.msra.mxu0 0.0
      %357 = vmatprep.subr.mxu0 0.0
      %358 = vmatpush1.msra.mxu0 0.0
      %359 = vmatprep.subr.mxu0 0.0
      %360 = vmatpush1.msra.mxu0 0.0
      %361 = vmatprep.subr.mxu0 0.0
      %362 = vmatpush1.msra.mxu0 0.0
      %363 = vmatprep.subr.mxu0 0.0
      %364 = vmatpush1.msra.mxu0 0.0
      %365 = vmatprep.subr.mxu0 0.0
      %366 = vmatpush1.msra.mxu0 0.0
      %367 = vmatprep.subr.mxu0 0.0
      %368 = vmatpush1.msra.mxu0 %v335
      %369 = vmatprep.subr.mxu0 0.0
      %370 = vmatpush2.msra.mxu0 0.0
      %371 = vmatprep.subr.mxu0 0.0
      %372 = vmatpush2.msra.mxu0 0.0
      %373 = vmatprep.subr.mxu0 0.0
      %374 = vmatpush2.msra.mxu0 0.0
      %375 = vmatprep.subr.mxu0 0.0
      %376 = vmatpush2.msra.mxu0 0.0
      %377 = vmatprep.subr.mxu0 0.0
      %378 = vmatpush2.msra.mxu0 0.0
      %379 = vmatprep.subr.mxu0 0.0
      %380 = vmatpush2.msra.mxu0 0.0
      %381 = vmatprep.subr.mxu0 0.0
      %382 = vmatpush2.msra.mxu0 0.0
      %383 = vmatprep.subr.mxu0 0.0
      %384 = vmatpush2.msra.mxu0 0.0
      %385 = vmatprep.subr.mxu0 0.0
      %386 = vmatpush2.msra.mxu0 0.0
      %387 = vmatprep.subr.mxu0 0.0
      %388 = vmatpush2.msra.mxu0 0.0
      %389 = vmatprep.subr.mxu0 0.0
      %390 = vmatpush2.msra.mxu0 0.0
      %391 = vmatprep.subr.mxu0 0.0
      %392 = vmatpush2.msra.mxu0 0.0
      %393 = vmatprep.subr.mxu0 0.0
      %394 = vmatpush2.msra.mxu0 0.0
      %395 = vmatprep.subr.mxu0 0.0
      %396 = vmatpush2.msra.mxu0 0.0
      %397 = vmatprep.subr.mxu0 0.0
      %398 = vmatpush2.msra.mxu0 0.0
      %399 = vmatprep.subr.mxu0 0.0
      %400 = vmatpush2.msra.mxu0 0.0
      %401 = vmatprep.mubr.f32.mxu0 0.0
      %402 = vmatmul.mubr.f32.gmra.mxu0 %v332
      %v403 = vpop.f32.mrf.mxu0
      %v404 = vadd.f32 0.0, %v403
      %v405 = vpop.f32.mrf.mxu0
      %406 = vdwg.mxu0
      %v407 = vadd.f32 %v322, %v404
      %408 = vrot.lane.b32.xlu0 %v148, 120
      %v409 = vpop.permute.xlu0 %408
      %v411 = vsel %vm163, %v409, 0.0
      %s412 = scalar_lea.vmem %s0, 24
      %v413 = vld [vmem:[%s412] sm:$0xff]
      %v415 = vsel %vm172, %v413, 0
      %v418 = vsel %vm176, %v411, 0
      %420 = vmatprep.subr.mxu0 0.0
      %421 = vmatpush1.msra.mxu0 0.0
      %422 = vmatprep.subr.mxu0 0.0
      %423 = vmatpush1.msra.mxu0 0.0
      %424 = vmatprep.subr.mxu0 0.0
      %425 = vmatpush1.msra.mxu0 0.0
      %426 = vmatprep.subr.mxu0 0.0
      %427 = vmatpush1.msra.mxu0 0.0
      %428 = vmatprep.subr.mxu0 0.0
      %429 = vmatpush1.msra.mxu0 0.0
      %430 = vmatprep.subr.mxu0 0.0
      %431 = vmatpush1.msra.mxu0 0.0
      %432 = vmatprep.subr.mxu0 0.0
      %433 = vmatpush1.msra.mxu0 0.0
      %434 = vmatprep.subr.mxu0 0.0
      %435 = vmatpush1.msra.mxu0 0.0
      %436 = vmatprep.subr.mxu0 0.0
      %437 = vmatpush1.msra.mxu0 0.0
      %438 = vmatprep.subr.mxu0 0.0
      %439 = vmatpush1.msra.mxu0 0.0
      %440 = vmatprep.subr.mxu0 0.0
      %441 = vmatpush1.msra.mxu0 0.0
      %442 = vmatprep.subr.mxu0 0.0
      %443 = vmatpush1.msra.mxu0 0.0
      %444 = vmatprep.subr.mxu0 0.0
      %445 = vmatpush1.msra.mxu0 0.0
      %446 = vmatprep.subr.mxu0 0.0
      %447 = vmatpush1.msra.mxu0 0.0
      %448 = vmatprep.subr.mxu0 0.0
      %449 = vmatpush1.msra.mxu0 0.0
      %450 = vmatprep.subr.mxu0 0.0
      %451 = vmatpush1.msra.mxu0 %v418
      %452 = vmatprep.subr.mxu0 0.0
      %453 = vmatpush2.msra.mxu0 0.0
      %454 = vmatprep.subr.mxu0 0.0
      %455 = vmatpush2.msra.mxu0 0.0
      %456 = vmatprep.subr.mxu0 0.0
      %457 = vmatpush2.msra.mxu0 0.0
      %458 = vmatprep.subr.mxu0 0.0
      %459 = vmatpush2.msra.mxu0 0.0
      %460 = vmatprep.subr.mxu0 0.0
      %461 = vmatpush2.msra.mxu0 0.0
      %462 = vmatprep.subr.mxu0 0.0
      %463 = vmatpush2.msra.mxu0 0.0
      %464 = vmatprep.subr.mxu0 0.0
      %465 = vmatpush2.msra.mxu0 0.0
      %466 = vmatprep.subr.mxu0 0.0
      %467 = vmatpush2.msra.mxu0 0.0
      %468 = vmatprep.subr.mxu0 0.0
      %469 = vmatpush2.msra.mxu0 0.0
      %470 = vmatprep.subr.mxu0 0.0
      %471 = vmatpush2.msra.mxu0 0.0
      %472 = vmatprep.subr.mxu0 0.0
      %473 = vmatpush2.msra.mxu0 0.0
      %474 = vmatprep.subr.mxu0 0.0
      %475 = vmatpush2.msra.mxu0 0.0
      %476 = vmatprep.subr.mxu0 0.0
      %477 = vmatpush2.msra.mxu0 0.0
      %478 = vmatprep.subr.mxu0 0.0
      %479 = vmatpush2.msra.mxu0 0.0
      %480 = vmatprep.subr.mxu0 0.0
      %481 = vmatpush2.msra.mxu0 0.0
      %482 = vmatprep.subr.mxu0 0.0
      %483 = vmatpush2.msra.mxu0 0.0
      %484 = vmatprep.mubr.f32.mxu0 0.0
      %485 = vmatmul.mubr.f32.gmra.mxu0 %v415
      %v486 = vpop.f32.mrf.mxu0
      %v487 = vadd.f32 0.0, %v486
      %v488 = vpop.f32.mrf.mxu0
      %489 = vdwg.mxu0
      %v490 = vadd.f32 %v407, %v487
      %s491 = scalar_lea.vmem %s0, 32
      %v492 = vld [vmem:[%s491] sm:$0xff]
      %493 = vrot.lane.b32.xlu0 %v148, 119
      %v494 = vpop.permute.xlu0 %493
      %v496 = vsel %vm172, %v492, 0
      %v498 = vsel %vm176, %v494, 0
      %500 = vmatprep.subr.mxu0 0.0
      %501 = vmatpush1.msra.mxu0 0.0
      %502 = vmatprep.subr.mxu0 0.0
      %503 = vmatpush1.msra.mxu0 0.0
      %504 = vmatprep.subr.mxu0 0.0
      %505 = vmatpush1.msra.mxu0 0.0
      %506 = vmatprep.subr.mxu0 0.0
      %507 = vmatpush1.msra.mxu0 0.0
      %508 = vmatprep.subr.mxu0 0.0
      %509 = vmatpush1.msra.mxu0 0.0
      %510 = vmatprep.subr.mxu0 0.0
      %511 = vmatpush1.msra.mxu0 0.0
      %512 = vmatprep.subr.mxu0 0.0
      %513 = vmatpush1.msra.mxu0 0.0
      %514 = vmatprep.subr.mxu0 0.0
      %515 = vmatpush1.msra.mxu0 0.0
      %516 = vmatprep.subr.mxu0 0.0
      %517 = vmatpush1.msra.mxu0 0.0
      %518 = vmatprep.subr.mxu0 0.0
      %519 = vmatpush1.msra.mxu0 0.0
      %520 = vmatprep.subr.mxu0 0.0
      %521 = vmatpush1.msra.mxu0 0.0
      %522 = vmatprep.subr.mxu0 0.0
      %523 = vmatpush1.msra.mxu0 0.0
      %524 = vmatprep.subr.mxu0 0.0
      %525 = vmatpush1.msra.mxu0 0.0
      %526 = vmatprep.subr.mxu0 0.0
      %527 = vmatpush1.msra.mxu0 0.0
      %528 = vmatprep.subr.mxu0 0.0
      %529 = vmatpush1.msra.mxu0 0.0
      %530 = vmatprep.subr.mxu0 0.0
      %531 = vmatpush1.msra.mxu0 %v498
      %532 = vmatprep.subr.mxu0 0.0
      %533 = vmatpush2.msra.mxu0 0.0
      %534 = vmatprep.subr.mxu0 0.0
      %535 = vmatpush2.msra.mxu0 0.0
      %536 = vmatprep.subr.mxu0 0.0
      %537 = vmatpush2.msra.mxu0 0.0
      %538 = vmatprep.subr.mxu0 0.0
      %539 = vmatpush2.msra.mxu0 0.0
      %540 = vmatprep.subr.mxu0 0.0
      %541 = vmatpush2.msra.mxu0 0.0
      %542 = vmatprep.subr.mxu0 0.0
      %543 = vmatpush2.msra.mxu0 0.0
      %544 = vmatprep.subr.mxu0 0.0
      %545 = vmatpush2.msra.mxu0 0.0
      %546 = vmatprep.subr.mxu0 0.0
      %547 = vmatpush2.msra.mxu0 0.0
      %548 = vmatprep.subr.mxu0 0.0
      %549 = vmatpush2.msra.mxu0 0.0
      %550 = vmatprep.subr.mxu0 0.0
      %551 = vmatpush2.msra.mxu0 0.0
      %552 = vmatprep.subr.mxu0 0.0
      %553 = vmatpush2.msra.mxu0 0.0
      %554 = vmatprep.subr.mxu0 0.0
      %555 = vmatpush2.msra.mxu0 0.0
      %556 = vmatprep.subr.mxu0 0.0
      %557 = vmatpush2.msra.mxu0 0.0
      %558 = vmatprep.subr.mxu0 0.0
      %559 = vmatpush2.msra.mxu0 0.0
      %560 = vmatprep.subr.mxu0 0.0
      %561 = vmatpush2.msra.mxu0 0.0
      %562 = vmatprep.subr.mxu0 0.0
      %563 = vmatpush2.msra.mxu0 0.0
      %564 = vmatprep.mubr.f32.mxu0 0.0
      %565 = vmatmul.mubr.f32.gmra.mxu0 %v496
      %v566 = vpop.f32.mrf.mxu0
      %v567 = vadd.f32 0.0, %v566
      %v568 = vpop.f32.mrf.mxu0
      %569 = vdwg.mxu0
      %v570 = vadd.f32 %v490, %v567
      %571 = vrot.lane.b32.xlu0 %v148, 118
      %v572 = vpop.permute.xlu0 %571
      %v574 = vsel %vm164, %v572, 0.0
      %s575 = scalar_lea.vmem %s0, 40
      %v576 = vld [vmem:[%s575] sm:$0xff]
      %v578 = vsel %vm172, %v576, 0
      %v581 = vsel %vm176, %v574, 0
      %583 = vmatprep.subr.mxu0 0.0
      %584 = vmatpush1.msra.mxu0 0.0
      %585 = vmatprep.subr.mxu0 0.0
      %586 = vmatpush1.msra.mxu0 0.0
      %587 = vmatprep.subr.mxu0 0.0
      %588 = vmatpush1.msra.mxu0 0.0
      %589 = vmatprep.subr.mxu0 0.0
      %590 = vmatpush1.msra.mxu0 0.0
      %591 = vmatprep.subr.mxu0 0.0
      %592 = vmatpush1.msra.mxu0 0.0
      %593 = vmatprep.subr.mxu0 0.0
      %594 = vmatpush1.msra.mxu0 0.0
      %595 = vmatprep.subr.mxu0 0.0
      %596 = vmatpush1.msra.mxu0 0.0
      %597 = vmatprep.subr.mxu0 0.0
      %598 = vmatpush1.msra.mxu0 0.0
      %599 = vmatprep.subr.mxu0 0.0
      %600 = vmatpush1.msra.mxu0 0.0
      %601 = vmatprep.subr.mxu0 0.0
      %602 = vmatpush1.msra.mxu0 0.0
      %603 = vmatprep.subr.mxu0 0.0
      %604 = vmatpush1.msra.mxu0 0.0
      %605 = vmatprep.subr.mxu0 0.0
      %606 = vmatpush1.msra.mxu0 0.0
      %607 = vmatprep.subr.mxu0 0.0
      %608 = vmatpush1.msra.mxu0 0.0
      %609 = vmatprep.subr.mxu0 0.0
      %610 = vmatpush1.msra.mxu0 0.0
      %611 = vmatprep.subr.mxu0 0.0
      %612 = vmatpush1.msra.mxu0 0.0
      %613 = vmatprep.subr.mxu0 0.0
      %614 = vmatpush1.msra.mxu0 %v581
      %615 = vmatprep.subr.mxu0 0.0
      %616 = vmatpush2.msra.mxu0 0.0
      %617 = vmatprep.subr.mxu0 0.0
      %618 = vmatpush2.msra.mxu0 0.0
      %619 = vmatprep.subr.mxu0 0.0
      %620 = vmatpush2.msra.mxu0 0.0
      %621 = vmatprep.subr.mxu0 0.0
      %622 = vmatpush2.msra.mxu0 0.0
      %623 = vmatprep.subr.mxu0 0.0
      %624 = vmatpush2.msra.mxu0 0.0
      %625 = vmatprep.subr.mxu0 0.0
      %626 = vmatpush2.msra.mxu0 0.0
      %627 = vmatprep.subr.mxu0 0.0
      %628 = vmatpush2.msra.mxu0 0.0
      %629 = vmatprep.subr.mxu0 0.0
      %630 = vmatpush2.msra.mxu0 0.0
      %631 = vmatprep.subr.mxu0 0.0
      %632 = vmatpush2.msra.mxu0 0.0
      %633 = vmatprep.subr.mxu0 0.0
      %634 = vmatpush2.msra.mxu0 0.0
      %635 = vmatprep.subr.mxu0 0.0
      %636 = vmatpush2.msra.mxu0 0.0
      %637 = vmatprep.subr.mxu0 0.0
      %638 = vmatpush2.msra.mxu0 0.0
      %639 = vmatprep.subr.mxu0 0.0
      %640 = vmatpush2.msra.mxu0 0.0
      %641 = vmatprep.subr.mxu0 0.0
      %642 = vmatpush2.msra.mxu0 0.0
      %643 = vmatprep.subr.mxu0 0.0
      %644 = vmatpush2.msra.mxu0 0.0
      %645 = vmatprep.subr.mxu0 0.0
      %646 = vmatpush2.msra.mxu0 0.0
      %647 = vmatprep.mubr.f32.mxu0 0.0
      %648 = vmatmul.mubr.f32.gmra.mxu0 %v578
      %v649 = vpop.f32.mrf.mxu0
      %v650 = vadd.f32 0.0, %v649
      %v651 = vpop.f32.mrf.mxu0
      %652 = vdwg.mxu0
      %v653 = vadd.f32 %v570, %v650
      %654 = vrot.lane.b32.xlu0 %v148, 112
      %v655 = vpop.permute.xlu0 %654
      %v657 = vsel %vm163, %v655, 0.0
      %s658 = scalar_lea.vmem %s0, 48
      %v659 = vld [vmem:[%s658] sm:$0xff]
      %v661 = vsel %vm172, %v659, 0
      %v664 = vsel %vm176, %v657, 0
      %666 = vmatprep.subr.mxu0 0.0
      %667 = vmatpush1.msra.mxu0 0.0
      %668 = vmatprep.subr.mxu0 0.0
      %669 = vmatpush1.msra.mxu0 0.0
      %670 = vmatprep.subr.mxu0 0.0
      %671 = vmatpush1.msra.mxu0 0.0
      %672 = vmatprep.subr.mxu0 0.0
      %673 = vmatpush1.msra.mxu0 0.0
      %674 = vmatprep.subr.mxu0 0.0
      %675 = vmatpush1.msra.mxu0 0.0
      %676 = vmatprep.subr.mxu0 0.0
      %677 = vmatpush1.msra.mxu0 0.0
      %678 = vmatprep.subr.mxu0 0.0
      %679 = vmatpush1.msra.mxu0 0.0
      %680 = vmatprep.subr.mxu0 0.0
      %681 = vmatpush1.msra.mxu0 0.0
      %682 = vmatprep.subr.mxu0 0.0
      %683 = vmatpush1.msra.mxu0 0.0
      %684 = vmatprep.subr.mxu0 0.0
      %685 = vmatpush1.msra.mxu0 0.0
      %686 = vmatprep.subr.mxu0 0.0
      %687 = vmatpush1.msra.mxu0 0.0
      %688 = vmatprep.subr.mxu0 0.0
      %689 = vmatpush1.msra.mxu0 0.0
      %690 = vmatprep.subr.mxu0 0.0
      %691 = vmatpush1.msra.mxu0 0.0
      %692 = vmatprep.subr.mxu0 0.0
      %693 = vmatpush1.msra.mxu0 0.0
      %694 = vmatprep.subr.mxu0 0.0
      %695 = vmatpush1.msra.mxu0 0.0
      %696 = vmatprep.subr.mxu0 0.0
      %697 = vmatpush1.msra.mxu0 %v664
      %698 = vmatprep.subr.mxu0 0.0
      %699 = vmatpush2.msra.mxu0 0.0
      %700 = vmatprep.subr.mxu0 0.0
      %701 = vmatpush2.msra.mxu0 0.0
      %702 = vmatprep.subr.mxu0 0.0
      %703 = vmatpush2.msra.mxu0 0.0
      %704 = vmatprep.subr.mxu0 0.0
      %705 = vmatpush2.msra.mxu0 0.0
      %706 = vmatprep.subr.mxu0 0.0
      %707 = vmatpush2.msra.mxu0 0.0
      %708 = vmatprep.subr.mxu0 0.0
      %709 = vmatpush2.msra.mxu0 0.0
      %710 = vmatprep.subr.mxu0 0.0
      %711 = vmatpush2.msra.mxu0 0.0
      %712 = vmatprep.subr.mxu0 0.0
      %713 = vmatpush2.msra.mxu0 0.0
      %714 = vmatprep.subr.mxu0 0.0
      %715 = vmatpush2.msra.mxu0 0.0
      %716 = vmatprep.subr.mxu0 0.0
      %717 = vmatpush2.msra.mxu0 0.0
      %718 = vmatprep.subr.mxu0 0.0
      %719 = vmatpush2.msra.mxu0 0.0
      %720 = vmatprep.subr.mxu0 0.0
      %721 = vmatpush2.msra.mxu0 0.0
      %722 = vmatprep.subr.mxu0 0.0
      %723 = vmatpush2.msra.mxu0 0.0
      %724 = vmatprep.subr.mxu0 0.0
      %725 = vmatpush2.msra.mxu0 0.0
      %726 = vmatprep.subr.mxu0 0.0
      %727 = vmatpush2.msra.mxu0 0.0
      %728 = vmatprep.subr.mxu0 0.0
      %729 = vmatpush2.msra.mxu0 0.0
      %730 = vmatprep.mubr.f32.mxu0 0.0
      %731 = vmatmul.mubr.f32.gmra.mxu0 %v661
      %v732 = vpop.f32.mrf.mxu0
      %v733 = vadd.f32 0.0, %v732
      %v734 = vpop.f32.mrf.mxu0
      %735 = vdwg.mxu0
      %v736 = vadd.f32 %v653, %v733
      %s737 = scalar_lea.vmem %s0, 56
      %v738 = vld [vmem:[%s737] sm:$0xff]
      %739 = vrot.lane.b32.xlu0 %v148, 111
      %v740 = vpop.permute.xlu0 %739
      %v742 = vsel %vm172, %v738, 0
      %v744 = vsel %vm176, %v740, 0
      %746 = vmatprep.subr.mxu0 0.0
      %747 = vmatpush1.msra.mxu0 0.0
      %748 = vmatprep.subr.mxu0 0.0
      %749 = vmatpush1.msra.mxu0 0.0
      %750 = vmatprep.subr.mxu0 0.0
      %751 = vmatpush1.msra.mxu0 0.0
      %752 = vmatprep.subr.mxu0 0.0
      %753 = vmatpush1.msra.mxu0 0.0
      %754 = vmatprep.subr.mxu0 0.0
      %755 = vmatpush1.msra.mxu0 0.0
      %756 = vmatprep.subr.mxu0 0.0
      %757 = vmatpush1.msra.mxu0 0.0
      %758 = vmatprep.subr.mxu0 0.0
      %759 = vmatpush1.msra.mxu0 0.0
      %760 = vmatprep.subr.mxu0 0.0
      %761 = vmatpush1.msra.mxu0 0.0
      %762 = vmatprep.subr.mxu0 0.0
      %763 = vmatpush1.msra.mxu0 0.0
      %764 = vmatprep.subr.mxu0 0.0
      %765 = vmatpush1.msra.mxu0 0.0
      %766 = vmatprep.subr.mxu0 0.0
      %767 = vmatpush1.msra.mxu0 0.0
      %768 = vmatprep.subr.mxu0 0.0
      %769 = vmatpush1.msra.mxu0 0.0
      %770 = vmatprep.subr.mxu0 0.0
      %771 = vmatpush1.msra.mxu0 0.0
      %772 = vmatprep.subr.mxu0 0.0
      %773 = vmatpush1.msra.mxu0 0.0
      %774 = vmatprep.subr.mxu0 0.0
      %775 = vmatpush1.msra.mxu0 0.0
      %776 = vmatprep.subr.mxu0 0.0
      %777 = vmatpush1.msra.mxu0 %v744
      %778 = vmatprep.subr.mxu0 0.0
      %779 = vmatpush2.msra.mxu0 0.0
      %780 = vmatprep.subr.mxu0 0.0
      %781 = vmatpush2.msra.mxu0 0.0
      %782 = vmatprep.subr.mxu0 0.0
      %783 = vmatpush2.msra.mxu0 0.0
      %784 = vmatprep.subr.mxu0 0.0
      %785 = vmatpush2.msra.mxu0 0.0
      %786 = vmatprep.subr.mxu0 0.0
      %787 = vmatpush2.msra.mxu0 0.0
      %788 = vmatprep.subr.mxu0 0.0
      %789 = vmatpush2.msra.mxu0 0.0
      %790 = vmatprep.subr.mxu0 0.0
      %791 = vmatpush2.msra.mxu0 0.0
      %792 = vmatprep.subr.mxu0 0.0
      %793 = vmatpush2.msra.mxu0 0.0
      %794 = vmatprep.subr.mxu0 0.0
      %795 = vmatpush2.msra.mxu0 0.0
      %796 = vmatprep.subr.mxu0 0.0
      %797 = vmatpush2.msra.mxu0 0.0
      %798 = vmatprep.subr.mxu0 0.0
      %799 = vmatpush2.msra.mxu0 0.0
      %800 = vmatprep.subr.mxu0 0.0
      %801 = vmatpush2.msra.mxu0 0.0
      %802 = vmatprep.subr.mxu0 0.0
      %803 = vmatpush2.msra.mxu0 0.0
      %804 = vmatprep.subr.mxu0 0.0
      %805 = vmatpush2.msra.mxu0 0.0
      %806 = vmatprep.subr.mxu0 0.0
      %807 = vmatpush2.msra.mxu0 0.0
      %808 = vmatprep.subr.mxu0 0.0
      %809 = vmatpush2.msra.mxu0 0.0
      %810 = vmatprep.mubr.f32.mxu0 0.0
      %811 = vmatmul.mubr.f32.gmra.mxu0 %v742
      %v812 = vpop.f32.mrf.mxu0
      %v813 = vadd.f32 0.0, %v812
      %v814 = vpop.f32.mrf.mxu0
      %815 = vdwg.mxu0
      %v816 = vadd.f32 %v736, %v813
      %817 = vrot.lane.b32.xlu0 %v148, 110
      %v818 = vpop.permute.xlu0 %817
      %v820 = vsel %vm164, %v818, 0.0
      %s821 = scalar_lea.vmem %s0, 64
      %v822 = vld [vmem:[%s821] sm:$0xff]
      %v824 = vsel %vm172, %v822, 0
      %v827 = vsel %vm176, %v820, 0
      %829 = vmatprep.subr.mxu0 0.0
      %830 = vmatpush1.msra.mxu0 0.0
      %831 = vmatprep.subr.mxu0 0.0
      %832 = vmatpush1.msra.mxu0 0.0
      %833 = vmatprep.subr.mxu0 0.0
      %834 = vmatpush1.msra.mxu0 0.0
      %835 = vmatprep.subr.mxu0 0.0
      %836 = vmatpush1.msra.mxu0 0.0
      %837 = vmatprep.subr.mxu0 0.0
      %838 = vmatpush1.msra.mxu0 0.0
      %839 = vmatprep.subr.mxu0 0.0
      %840 = vmatpush1.msra.mxu0 0.0
      %841 = vmatprep.subr.mxu0 0.0
      %842 = vmatpush1.msra.mxu0 0.0
      %843 = vmatprep.subr.mxu0 0.0
      %844 = vmatpush1.msra.mxu0 0.0
      %845 = vmatprep.subr.mxu0 0.0
      %846 = vmatpush1.msra.mxu0 0.0
      %847 = vmatprep.subr.mxu0 0.0
      %848 = vmatpush1.msra.mxu0 0.0
      %849 = vmatprep.subr.mxu0 0.0
      %850 = vmatpush1.msra.mxu0 0.0
      %851 = vmatprep.subr.mxu0 0.0
      %852 = vmatpush1.msra.mxu0 0.0
      %853 = vmatprep.subr.mxu0 0.0
      %854 = vmatpush1.msra.mxu0 0.0
      %855 = vmatprep.subr.mxu0 0.0
      %856 = vmatpush1.msra.mxu0 0.0
      %857 = vmatprep.subr.mxu0 0.0
      %858 = vmatpush1.msra.mxu0 0.0
      %859 = vmatprep.subr.mxu0 0.0
      %860 = vmatpush1.msra.mxu0 %v827
      %861 = vmatprep.subr.mxu0 0.0
      %862 = vmatpush2.msra.mxu0 0.0
      %863 = vmatprep.subr.mxu0 0.0
      %864 = vmatpush2.msra.mxu0 0.0
      %865 = vmatprep.subr.mxu0 0.0
      %866 = vmatpush2.msra.mxu0 0.0
      %867 = vmatprep.subr.mxu0 0.0
      %868 = vmatpush2.msra.mxu0 0.0
      %869 = vmatprep.subr.mxu0 0.0
      %870 = vmatpush2.msra.mxu0 0.0
      %871 = vmatprep.subr.mxu0 0.0
      %872 = vmatpush2.msra.mxu0 0.0
      %873 = vmatprep.subr.mxu0 0.0
      %874 = vmatpush2.msra.mxu0 0.0
      %875 = vmatprep.subr.mxu0 0.0
      %876 = vmatpush2.msra.mxu0 0.0
      %877 = vmatprep.subr.mxu0 0.0
      %878 = vmatpush2.msra.mxu0 0.0
      %879 = vmatprep.subr.mxu0 0.0
      %880 = vmatpush2.msra.mxu0 0.0
      %881 = vmatprep.subr.mxu0 0.0
      %882 = vmatpush2.msra.mxu0 0.0
      %883 = vmatprep.subr.mxu0 0.0
      %884 = vmatpush2.msra.mxu0 0.0
      %885 = vmatprep.subr.mxu0 0.0
      %886 = vmatpush2.msra.mxu0 0.0
      %887 = vmatprep.subr.mxu0 0.0
      %888 = vmatpush2.msra.mxu0 0.0
      %889 = vmatprep.subr.mxu0 0.0
      %890 = vmatpush2.msra.mxu0 0.0
      %891 = vmatprep.subr.mxu0 0.0
      %892 = vmatpush2.msra.mxu0 0.0
      %893 = vmatprep.mubr.f32.mxu0 0.0
      %894 = vmatmul.mubr.f32.gmra.mxu0 %v824
      %v895 = vpop.f32.mrf.mxu0
      %v896 = vadd.f32 0.0, %v895
      %v897 = vpop.f32.mrf.mxu0
      %898 = vdwg.mxu0
      %v899 = vadd.f32 %v816, %v896
      %vm900 = vcmask 523264
      %901 = vst.msk [vmem:[%s138] sm:$0xff] %vm900, %v899
      %p902 = scmp.lt.s32.totalorder %s13, 1
      %s903 = scalar_select %p902, %s13, 1
      %s904 = smul.addr %s903, 8
      %s905 = scalar_lea.vmem %s2, %s904
      // Predicated region
      $region29: #{fcsubnet_forward.1} parent=27 // pred_check
        %p906 = pneg %p78
      $region30: #{fcsubnet_forward.1} parent=27 // pred_check_branch
        %908 = sbr.rel (%p906) target = $region32
      $region31: #{fcsubnet_forward.1} parent=27 // pred_region
        _
      $region32: #{fcsubnet_forward.1} parent=27 // pred_fallthru
        _
    $region28: #{fcsubnet_forward.1} parent=5 // pred_fallthru
      _
    %p909 = scmp.le.s32.totalorder 2, %s8
    // Predicated region
    $region33: #{fcsubnet_forward.1} parent=5 // pred_check
      %p910 = pneg %p909
    $region34: #{fcsubnet_forward.1} parent=5 // pred_check_branch
      %912 = sbr.rel (%p910) target = $region36
    $region35: #{fcsubnet_forward.1} parent=5 // pred_region
      %s913 = ssub.s32 %s8, 2
      // Predicated region
      $region37: #{fcsubnet_forward.1} parent=35 // pred_check
        %p914 = pneg %p84
      $region38: #{fcsubnet_forward.1} parent=35 // pred_check_branch
        %916 = sbr.rel (%p914) target = $region40
      $region39: #{fcsubnet_forward.1} parent=35 // pred_region
        %p917 = scmp.lt.s32.totalorder %s14, 1
        %s918 = scalar_select %p917, %s14, 1
        %s919 = smul.addr %s918, 8
        %s920 = scalar_lea.vmem %s2, %s919
      $region40: #{fcsubnet_forward.1} parent=35 // pred_fallthru
        _
    $region36: #{fcsubnet_forward.1} parent=5 // pred_fallthru
      _
  $region6: #{fcsubnet_forward.1} parent=0 // loop_footer
    %s12 = sadd.s32 1, %s8
  $region7: #{fcsubnet_forward.1} parent=0 // loop_footer_branch
    %7 = sbr.rel target = $region3
  $region8: #{fcsubnet_forward.1} parent=0 // loop_exit
    _

</llo_original>
